<compile_context>
chip_gen: v6e
topology: v6e:2x2x1
jax: 0.10.0
libtpu: 0.0.40
codegen_flags: <defaults>
</compile_context>

<pallas_src>
import functools

import jax
import jax.numpy as jnp
from jax import lax
from jax.experimental import pallas as pl
from jax.experimental.pallas import tpu as pltpu

KSIZE = 3  # kernel_size=3, padding=1


def _round_up(x, m):
    return (x + m - 1) // m * m


def conv_ffn_kernel(x_ref, w1_ref, b1_ref, w2_ref, b2_ref, o_ref, *, seq_len):
    """Grid = (batch, seq_tile).

    x_ref:  (1, L_pad+4, d_model) bf16  padded input (2 zero rows front, >=2 back),
                                        resident across the seq-tile axis.
    w1_ref: (3, d_model, d_ff)    bf16  w1[k, i, o] == torch_conv1.weight[o, i, k]
    b1_ref: (1, d_ff)             f32
    w2_ref: (3, d_ff, d_model)    bf16
    b2_ref: (1, d_model)          f32
    o_ref:  (1, T, d_model)       f32   output rows [t*T, t*T+T) of the padded sequence
    """
    t = pl.program_id(1)
    T = o_ref.shape[1]
    W = T + 4          # input window rows (halo of 2 each side)
    M = T + 2          # hidden rows needed for this output tile (halo of 1 each side)

    # 8-aligned dynamic window into the sequence-resident input block.
    start = pl.multiple_of(t * T, T)
    xw = x_ref[0, pl.ds(start, W), :]                            # (T+4, d_model) bf16

    # ---- conv1: pre[j] = sum_k xw[j+k] @ W1[k]  (valid for j in [0, T+2)) ----
    # Tap shift is applied to the f32 matmul outputs; the MXU operand is never re-sliced.
    z0 = jnp.dot(xw, w1_ref[0], preferred_element_type=jnp.float32)
    z1 = jnp.dot(xw, w1_ref[1], preferred_element_type=jnp.float32)
    z2 = jnp.dot(xw, w1_ref[2], preferred_element_type=jnp.float32)
    pre1 = z0[:M] + z1[1:M + 1] + z2[2:M + 2]                    # (T+2, d_ff) f32
    h = jnp.maximum(pre1 + b1_ref[...], 0.0)                     # bias + ReLU in f32
    # TODO(synk): nn.Dropout is identity in eval mode; training-mode dropout not implemented.

    # Zero hidden rows outside the real sequence: conv2's zero padding and the tail
    # padding added to make the sequence a multiple of the tile.
    g = t * T - 1 + lax.broadcasted_iota(jnp.int32, (M, 1), 0)   # global hidden row ids
    h = jnp.where((g >= 0) & (g < seq_len), h, 0.0)
    h = h.astype(w2_ref.dtype)                                   # bf16 for the MXU

    # ---- conv2: out[i] = sum_k h[i+k] @ W2[k]  (i in [0, T)) ----
    u0 = jnp.dot(h, w2_ref[0], preferred_element_type=jnp.float32)
    u1 = jnp.dot(h, w2_ref[1], preferred_element_type=jnp.float32)
    u2 = jnp.dot(h, w2_ref[2], preferred_element_type=jnp.float32)
    out = u0[:T] + u1[1:T + 1] + u2[2:T + 2] + b2_ref[...]       # (T, d_model) f32
    o_ref[0] = out.astype(o_ref.dtype)


def conv_feed_forward(x_ncl, w1, b1, w2, b2, *, seq_tile=256,
                      compute_dtype=jnp.bfloat16):
    """x_ncl: (B, d_model, L) float32 (PyTorch NCL convention)."""
    B, d_model, L = x_ncl.shape
    d_ff = w1.shape[2]

    T = min(_round_up(L, 8), _round_up(seq_tile, 8))   # seq tile, multiple of 8
    L_pad = _round_up(L, T)
    num_tiles = L_pad // T
    Lp4 = L_pad + 4

    # NCL -> NLC, cast to bf16, pad seq by 2 zero rows front / (L_pad - L + 2) back
    # (single fused XLA pass; boundary correctness is enforced in-kernel by masking).
    x_nlc = jnp.transpose(x_ncl, (0, 2, 1)).astype(compute_dtype)
    x_pad = jnp.pad(x_nlc, ((0, 0), (2, Lp4 - 2 - L), (0, 0)))

    w1c = w1.astype(compute_dtype)
    w2c = w2.astype(compute_dtype)
    b1f = b1.astype(jnp.float32)
    b2f = b2.astype(jnp.float32)

    kernel = functools.partial(conv_ffn_kernel, seq_len=L)

    out_nlc = pl.pallas_call(
        kernel,
        out_shape=jax.ShapeDtypeStruct((B, L_pad, d_model), jnp.float32),
        grid_spec=pltpu.PrefetchScalarGridSpec(
            num_scalar_prefetch=0,
            grid=(B, num_tiles),
            in_specs=[
                pl.BlockSpec((1, Lp4, d_model), lambda b, t: (b, 0, 0)),
                pl.BlockSpec((KSIZE, d_model, d_ff), lambda b, t: (0, 0, 0)),
                pl.BlockSpec((1, d_ff), lambda b, t: (0, 0)),
                pl.BlockSpec((KSIZE, d_ff, d_model), lambda b, t: (0, 0, 0)),
                pl.BlockSpec((1, d_model), lambda b, t: (0, 0)),
            ],
            out_specs=pl.BlockSpec((1, T, d_model), lambda b, t: (b, t, 0)),
        ),
        compiler_params=pltpu.CompilerParams(
            dimension_semantics=("parallel", "parallel"),
            vmem_limit_bytes=48 * 1024 * 1024,
        ),
    )(x_pad, w1c, b1f, w2c, b2f)

    # strip seq-tail padding, NLC -> NCL
    return jnp.transpose(out_nlc[:, :L, :], (0, 2, 1))


def _reference(x_ncl, w1, b1, w2, b2, compute_dtype):
    """Pure-JAX reference (PyTorch Conv1d semantics) with the same bf16-input /
    f32-accumulation precision as the kernel."""
    xc = x_ncl.astype(compute_dtype).astype(jnp.float32)
    W1 = jnp.transpose(w1, (2, 1, 0)).astype(compute_dtype).astype(jnp.float32)
    W2 = jnp.transpose(w2, (2, 1, 0)).astype(compute_dtype).astype(jnp.float32)
    dn = lax.conv_dimension_numbers(xc.shape, W1.shape, ("NCH", "OIH", "NCH"))
    h = lax.conv_general_dilated(xc, W1, (1,), ((1, 1),), dimension_numbers=dn,
                                 precision=lax.Precision.HIGHEST)
    h = jnp.maximum(h + b1[0][None, :, None].astype(jnp.float32), 0.0)
    h = h.astype(compute_dtype).astype(jnp.float32)   # kernel casts h to bf16 before conv2
    dn2 = lax.conv_dimension_numbers(h.shape, W2.shape, ("NCH", "OIH", "NCH"))
    o = lax.conv_general_dilated(h, W2, (1,), ((1, 1),), dimension_numbers=dn2,
                                 precision=lax.Precision.HIGHEST)
    return o + b2[0][None, :, None].astype(jnp.float32)


if __name__ == "__main__":
    B, d_model, d_ff, L = 2, 32, 64, 20

    key = jax.random.PRNGKey(0)
    kx, k1, k2, k3, k4 = jax.random.split(key, 5)

    x = jax.random.normal(kx, (B, d_model, L), jnp.float32)
    # Shapes per nn.Conv1d(d_model, d_ff, 3) / nn.Conv1d(d_ff, d_model, 3):
    # w[k, in, out] == torch weight[out, in, k].
    w1 = jax.random.normal(k1, (KSIZE, d_model, d_ff), jnp.float32) * 0.05
    b1 = jax.random.normal(k2, (1, d_ff), jnp.float32) * 0.05
    w2 = jax.random.normal(k3, (KSIZE, d_ff, d_model), jnp.float32) * 0.05
    b2 = jax.random.normal(k4, (1, d_model), jnp.float32) * 0.05

    # small seq tile so multiple tiles + tail padding are exercised
    out = conv_feed_forward(x, w1, b1, w2, b2, seq_tile=8)
    out = jax.block_until_ready(out)

    ref = jax.block_until_ready(_reference(x, w1, b1, w2, b2, jnp.bfloat16))
    assert out.shape == (B, d_model, L)
    assert jnp.allclose(out, ref, rtol=1e-3, atol=1e-3), (
        f"mismatch vs reference (max abs err {jnp.max(jnp.abs(out - ref))})")

    print("KERNEL_OK")
</pallas_src>

<mosaic_0001>
module attributes {stable_mosaic.version = 11 : i64} {
  func.func @conv_ffn_kernel(%arg0: i32, %arg1: i32, %arg2: memref<1x28x32xbf16, #tpu.memory_space<vmem>>, %arg3: memref<3x32x64xbf16, #tpu.memory_space<vmem>>, %arg4: memref<1x64xf32, #tpu.memory_space<vmem>>, %arg5: memref<3x64x32xbf16, #tpu.memory_space<vmem>>, %arg6: memref<1x32xf32, #tpu.memory_space<vmem>>, %arg7: memref<1x8x32xf32, #tpu.memory_space<vmem>>) attributes {dimension_semantics = [#tpu.dimension_semantics<parallel>, #tpu.dimension_semantics<parallel>], iteration_bounds = array<i64: 2, 3>, scalar_prefetch = 0 : i64, scratch_operands = 0 : i64, tpu.core_type = #tpu.core_type<tc>, window_params = [{transform_indices = @transform_0, window_bounds = array<i64: 1, 28, 32>}, {pipeline_mode = #tpu.pipeline_mode<synchronous>, transform_indices = @transform_1, window_bounds = array<i64: 3, 32, 64>}, {pipeline_mode = #tpu.pipeline_mode<synchronous>, transform_indices = @transform_2, window_bounds = array<i64: 1, 64>}, {pipeline_mode = #tpu.pipeline_mode<synchronous>, transform_indices = @transform_3, window_bounds = array<i64: 3, 64, 32>}, {pipeline_mode = #tpu.pipeline_mode<synchronous>, transform_indices = @transform_4, window_bounds = array<i64: 1, 32>}, {transform_indices = @transform_5, window_bounds = array<i64: 1, 8, 32>}]} {
    %c8_i32 = arith.constant 8 : i32
    %0 = arith.muli %arg1, %c8_i32 : i32
    %1 = tpu.assume_multiple %0, 8 : i32
    %c0 = arith.constant 0 : index
    %2 = arith.index_cast %1 : i32 to index
    %c0_0 = arith.constant 0 : index
    %3 = vector.load %arg2[%c0, %2, %c0_0] : memref<1x28x32xbf16, #tpu.memory_space<vmem>>, vector<1x12x32xbf16>
    %4 = vector.shape_cast %3 : vector<1x12x32xbf16> to vector<12x32xbf16>
    %c0_1 = arith.constant 0 : index
    %c0_2 = arith.constant 0 : index
    %c0_3 = arith.constant 0 : index
    %5 = vector.load %arg3[%c0_1, %c0_2, %c0_3] : memref<3x32x64xbf16, #tpu.memory_space<vmem>>, vector<1x32x64xbf16>
    %6 = vector.shape_cast %5 : vector<1x32x64xbf16> to vector<32x64xbf16>
    %cst = arith.constant dense<0.000000e+00> : vector<12x64xf32>
    %7 = tpu.matmul %4, %6, %cst {dimension_numbers = #tpu.dot_dimension_numbers<[1], [0], [0], [1], [0, 0, 1, 1], [], []>} : vector<12x32xbf16>, vector<32x64xbf16>, vector<12x64xf32> -> vector<12x64xf32>
    %c1 = arith.constant 1 : index
    %c0_4 = arith.constant 0 : index
    %c0_5 = arith.constant 0 : index
    %8 = vector.load %arg3[%c1, %c0_4, %c0_5] : memref<3x32x64xbf16, #tpu.memory_space<vmem>>, vector<1x32x64xbf16>
    %9 = vector.shape_cast %8 : vector<1x32x64xbf16> to vector<32x64xbf16>
    %cst_6 = arith.constant dense<0.000000e+00> : vector<12x64xf32>
    %10 = tpu.matmul %4, %9, %cst_6 {dimension_numbers = #tpu.dot_dimension_numbers<[1], [0], [0], [1], [0, 0, 1, 1], [], []>} : vector<12x32xbf16>, vector<32x64xbf16>, vector<12x64xf32> -> vector<12x64xf32>
    %c2 = arith.constant 2 : index
    %c0_7 = arith.constant 0 : index
    %c0_8 = arith.constant 0 : index
    %11 = vector.load %arg3[%c2, %c0_7, %c0_8] : memref<3x32x64xbf16, #tpu.memory_space<vmem>>, vector<1x32x64xbf16>
    %12 = vector.shape_cast %11 : vector<1x32x64xbf16> to vector<32x64xbf16>
    %cst_9 = arith.constant dense<0.000000e+00> : vector<12x64xf32>
    %13 = tpu.matmul %4, %12, %cst_9 {dimension_numbers = #tpu.dot_dimension_numbers<[1], [0], [0], [1], [0, 0, 1, 1], [], []>} : vector<12x32xbf16>, vector<32x64xbf16>, vector<12x64xf32> -> vector<12x64xf32>
    %14 = vector.extract_strided_slice %7 {offsets = [0, 0], sizes = [10, 64], strides = [1, 1]} : vector<12x64xf32> to vector<10x64xf32>
    %15 = vector.extract_strided_slice %10 {offsets = [1, 0], sizes = [10, 64], strides = [1, 1]} : vector<12x64xf32> to vector<10x64xf32>
    %16 = arith.addf %14, %15 : vector<10x64xf32>
    %17 = vector.extract_strided_slice %13 {offsets = [2, 0], sizes = [10, 64], strides = [1, 1]} : vector<12x64xf32> to vector<10x64xf32>
    %18 = arith.addf %16, %17 : vector<10x64xf32>
    %c0_10 = arith.constant 0 : index
    %c0_11 = arith.constant 0 : index
    %19 = vector.load %arg4[%c0_10, %c0_11] : memref<1x64xf32, #tpu.memory_space<vmem>>, vector<1x64xf32>
    %20 = vector.broadcast %19 : vector<1x64xf32> to vector<10x64xf32>
    %21 = arith.addf %18, %20 : vector<10x64xf32>
    %cst_12 = arith.constant 0.000000e+00 : f32
    %22 = vector.broadcast %cst_12 : f32 to vector<10x64xf32>
    %23 = arith.maximumf %21, %22 : vector<10x64xf32>
    %c8_i32_13 = arith.constant 8 : i32
    %24 = arith.muli %arg1, %c8_i32_13 : i32
    %c1_i32 = arith.constant 1 : i32
    %25 = arith.subi %24, %c1_i32 : i32
    %26 = tpu.iota {dimensions = array<i32: 0>} : vector<10x1xi32>
    %27 = vector.broadcast %25 : i32 to vector<10x1xi32>
    %28 = arith.addi %27, %26 : vector<10x1xi32>
    %c0_i32 = arith.constant 0 : i32
    %29 = vector.broadcast %c0_i32 : i32 to vector<10x1xi32>
    %30 = arith.cmpi sge, %28, %29 : vector<10x1xi32>
    %c20_i32 = arith.constant 20 : i32
    %31 = vector.broadcast %c20_i32 : i32 to vector<10x1xi32>
    %32 = arith.cmpi slt, %28, %31 : vector<10x1xi32>
    %33 = arith.andi %30, %32 : vector<10x1xi1>
    %cst_14 = arith.constant 0.000000e+00 : f32
    %34 = vector.shape_cast %33 : vector<10x1xi1> to vector<10x1xi1>
    %35 = vector.broadcast %34 : vector<10x1xi1> to vector<10x64xi1>
    %36 = vector.broadcast %cst_14 : f32 to vector<10x64xf32>
    %37 = arith.select %35, %23, %36 : vector<10x64xi1>, vector<10x64xf32>
    %38 = arith.truncf %37 : vector<10x64xf32> to vector<10x64xbf16>
    %c0_15 = arith.constant 0 : index
    %c0_16 = arith.constant 0 : index
    %c0_17 = arith.constant 0 : index
    %39 = vector.load %arg5[%c0_15, %c0_16, %c0_17] : memref<3x64x32xbf16, #tpu.memory_space<vmem>>, vector<1x64x32xbf16>
    %40 = vector.shape_cast %39 : vector<1x64x32xbf16> to vector<64x32xbf16>
    %cst_18 = arith.constant dense<0.000000e+00> : vector<10x32xf32>
    %41 = tpu.matmul %38, %40, %cst_18 {dimension_numbers = #tpu.dot_dimension_numbers<[1], [0], [0], [1], [0, 0, 1, 1], [], []>} : vector<10x64xbf16>, vector<64x32xbf16>, vector<10x32xf32> -> vector<10x32xf32>
    %c1_19 = arith.constant 1 : index
    %c0_20 = arith.constant 0 : index
    %c0_21 = arith.constant 0 : index
    %42 = vector.load %arg5[%c1_19, %c0_20, %c0_21] : memref<3x64x32xbf16, #tpu.memory_space<vmem>>, vector<1x64x32xbf16>
    %43 = vector.shape_cast %42 : vector<1x64x32xbf16> to vector<64x32xbf16>
    %cst_22 = arith.constant dense<0.000000e+00> : vector<10x32xf32>
    %44 = tpu.matmul %38, %43, %cst_22 {dimension_numbers = #tpu.dot_dimension_numbers<[1], [0], [0], [1], [0, 0, 1, 1], [], []>} : vector<10x64xbf16>, vector<64x32xbf16>, vector<10x32xf32> -> vector<10x32xf32>
    %c2_23 = arith.constant 2 : index
    %c0_24 = arith.constant 0 : index
    %c0_25 = arith.constant 0 : index
    %45 = vector.load %arg5[%c2_23, %c0_24, %c0_25] : memref<3x64x32xbf16, #tpu.memory_space<vmem>>, vector<1x64x32xbf16>
    %46 = vector.shape_cast %45 : vector<1x64x32xbf16> to vector<64x32xbf16>
    %cst_26 = arith.constant dense<0.000000e+00> : vector<10x32xf32>
    %47 = tpu.matmul %38, %46, %cst_26 {dimension_numbers = #tpu.dot_dimension_numbers<[1], [0], [0], [1], [0, 0, 1, 1], [], []>} : vector<10x64xbf16>, vector<64x32xbf16>, vector<10x32xf32> -> vector<10x32xf32>
    %48 = vector.extract_strided_slice %41 {offsets = [0, 0], sizes = [8, 32], strides = [1, 1]} : vector<10x32xf32> to vector<8x32xf32>
    %49 = vector.extract_strided_slice %44 {offsets = [1, 0], sizes = [8, 32], strides = [1, 1]} : vector<10x32xf32> to vector<8x32xf32>
    %50 = arith.addf %48, %49 : vector<8x32xf32>
    %51 = vector.extract_strided_slice %47 {offsets = [2, 0], sizes = [8, 32], strides = [1, 1]} : vector<10x32xf32> to vector<8x32xf32>
    %52 = arith.addf %50, %51 : vector<8x32xf32>
    %c0_27 = arith.constant 0 : index
    %c0_28 = arith.constant 0 : index
    %53 = vector.load %arg6[%c0_27, %c0_28] : memref<1x32xf32, #tpu.memory_space<vmem>>, vector<1x32xf32>
    %54 = vector.broadcast %53 : vector<1x32xf32> to vector<8x32xf32>
    %55 = arith.addf %52, %54 : vector<8x32xf32>
    %c0_29 = arith.constant 0 : index
    %c0_30 = arith.constant 0 : index
    %c0_31 = arith.constant 0 : index
    %56 = vector.load %arg7[%c0_29, %c0_30, %c0_31] : memref<1x8x32xf32, #tpu.memory_space<vmem>>, vector<1x8x32xf32>
    %57 = vector.shape_cast %56 : vector<1x8x32xf32> to vector<8x32xf32>
    %58 = vector.shape_cast %55 : vector<8x32xf32> to vector<1x8x32xf32>
    tpu.vector_store %arg7[%c0_29, %c0_30, %c0_31], %58 {strides = array<i32>} : memref<1x8x32xf32, #tpu.memory_space<vmem>>, vector<1x8x32xf32>,
    return
  }
  func.func @transform_0(%arg0: i32, %arg1: i32) -> (i32, i32, i32) {
    %c0_i32 = arith.constant 0 : i32
    %c0_i32_0 = arith.constant 0 : i32
    %c0_i32_1 = arith.constant 0 : i32
    return %arg0, %c0_i32, %c0_i32_0 : i32, i32, i32
  }
  func.func @transform_1(%arg0: i32, %arg1: i32) -> (i32, i32, i32) {
    %c0_i32 = arith.constant 0 : i32
    %c0_i32_0 = arith.constant 0 : i32
    %c0_i32_1 = arith.constant 0 : i32
    %c0_i32_2 = arith.constant 0 : i32
    return %c0_i32, %c0_i32_0, %c0_i32_1 : i32, i32, i32
  }
  func.func @transform_2(%arg0: i32, %arg1: i32) -> (i32, i32) {
    %c0_i32 = arith.constant 0 : i32
    %c0_i32_0 = arith.constant 0 : i32
    %c0_i32_1 = arith.constant 0 : i32
    return %c0_i32, %c0_i32_0 : i32, i32
  }
  func.func @transform_3(%arg0: i32, %arg1: i32) -> (i32, i32, i32) {
    %c0_i32 = arith.constant 0 : i32
    %c0_i32_0 = arith.constant 0 : i32
    %c0_i32_1 = arith.constant 0 : i32
    %c0_i32_2 = arith.constant 0 : i32
    return %c0_i32, %c0_i32_0, %c0_i32_1 : i32, i32, i32
  }
  func.func @transform_4(%arg0: i32, %arg1: i32) -> (i32, i32) {
    %c0_i32 = arith.constant 0 : i32
    %c0_i32_0 = arith.constant 0 : i32
    %c0_i32_1 = arith.constant 0 : i32
    return %c0_i32, %c0_i32_0 : i32, i32
  }
  func.func @transform_5(%arg0: i32, %arg1: i32) -> (i32, i32, i32) {
    %c0_i32 = arith.constant 0 : i32
    %c0_i32_0 = arith.constant 0 : i32
    return %arg0, %arg1, %c0_i32 : i32, i32, i32
  }
}

</mosaic_0001>

<llo_original>
// kernel: tpu_custom_call.1
$region0: #{tpu_custom_call.1}
  #allocation0 [shape = 'u32[]', space=smem, size = 0x4, offset = 0x4, fixed_abs, tag = 'smem constant byte address 0x4 - core index']
  #allocation1 [shape = 'u32[144,128]{1,0:T(1,128)}', space=vmem, size = 0x12000, scoped, tag = 'internal scratch']
  %s0 = inlined_call_operand.vmem [shape: bf16[2,28,32], index: 0, kind: input, shape index: {}]
  %s1 = inlined_call_operand.vmem [shape: bf16[3,32,64], index: 1, kind: input, shape index: {}]
  %s2 = inlined_call_operand.vmem [shape: f32[1,64], index: 2, kind: input, shape index: {}]
  %s3 = inlined_call_operand.vmem [shape: bf16[3,64,32], index: 3, kind: input, shape index: {}]
  %s4 = inlined_call_operand.vmem [shape: f32[1,32], index: 4, kind: input, shape index: {}]
  %s5 = inlined_call_operand.hbm [shape: f32[2,24,32], index: 5, kind: output, shape index: {}]
  %s6 = sld [smem:[#allocation0]]
  $region53: #{tpu_custom_call.1} parent=0
    _
  %s8 = ssub.s32 1, %s6
  %s9 = scalar_select 0, %s8, %s6
  $region1: #{tpu_custom_call.1} parent=0
    #allocation2 [shape = 'u8[8192]{0}', space=vmem, size = 0x2000, scoped, tag = 'output window, operand 0']
    #allocation3 [shape = 's32[2]{0}', space=sflag, size = 0x8, scoped, tag = 'scoped memory for tpu_custom_call.1']
    %10 = vsyncpa [#allocation3], 0
    %s11 = scalar_lea.sflag [#allocation3], 1
    %12 = vsyncpa %s11, 0
    loop: start=0, step=1, limit=8
    $region2: #{tpu_custom_call.1} parent=1 // loop_pre_header
      _
    $region3: #{tpu_custom_call.1} parent=1 // loop_header
      %s14 = sphi 0, %s18
      %p15 = scmp.ge.s32.totalorder %s14, 8
      %s21 = sphi 0, %s33
      %s22 = sphi 0, %s29
      %s23 = sphi 0, %s21
      %s24 = sphi 0, %s22
      %s25 = sphi 0, %s23
      %s26 = sphi 0, %s24
      %s36 = sphi 0, %s38
      %s39 = sphi 0, %s36
      %s40 = sphi 0, %s39
      %s56 = sphi 0, %s40
      %s60 = sphi 0, %s60
      %s62 = sphi 0, %s60
      %s63 = sphi 0, %s62
      %s77 = sphi 0, %s63
      %s81 = sphi 0, %s81
      %s83 = sphi 0, %s81
      %s84 = sphi 0, %s83
      %s98 = sphi 0, %s84
      %s102 = sphi 0, %s102
      %s104 = sphi 0, %s102
      %s105 = sphi 0, %s104
      %s119 = sphi 0, %s105
      %s123 = sphi 0, %s123
      %s125 = sphi 0, %s123
      %s126 = sphi 0, %s125
      %s140 = sphi 0, %s126
      %s148 = sphi 0, %s150
      %s151 = sphi 0, %s148
      %s152 = sphi 0, %s151
      %s168 = sphi 0, %s152
    $region4: #{tpu_custom_call.1} parent=1 // loop_header_branch
      %17 = sbr.rel (%p15) target = $region8
    $region5: #{tpu_custom_call.1} parent=1 // loop_body
      %s19 = ssub.s32 %s14, 1
      %s20 = ssub.s32 %s14, 2
      %s27 = sadd.s32 1, %s22
      %p28 = scmp.ge.s32.totalorder %s27, 3
      %s29 = scalar_select %p28, 0, %s27
      %s30 = sadd.s32 1, %s21
      %s31 = scalar_select %p28, %s30, %s21
      %p32 = scmp.ge.s32.totalorder %s31, 2
      %s33 = scalar_select %p32, 0, %s31
      %s34 = ssub.s32 %s21, %s33
      %p35 = scmp.eq.s32.totalorder %s34, 0
      %s37 = sadd.s32 %s36, 1
      %s38 = scalar_select %p35, %s36, %s37
      %p41 = pneg %p35
      %p42 = scmp.eq.s32.totalorder %s14, 5
      %p43 = por %p41, %p42
      %p44 = scmp.ne.s32.totalorder %s36, %s39
      %p45 = scmp.eq.s32.totalorder %s14, 0
      %p46 = por %p44, %p45
      %p47 = scmp.ne.s32.totalorder %s36, %s39
      %p48 = scmp.eq.s32.totalorder %s19, 5
      %p49 = por %p47, %p48
      %p50 = scmp.ne.s32.totalorder %s39, %s40
      %p51 = scmp.eq.s32.totalorder %s19, 0
      %p52 = por %p50, %p51
      %p53 = scmp.ne.s32.totalorder %s39, %s40
      %p54 = scmp.eq.s32.totalorder %s20, 5
      %p55 = por %p53, %p54
      %p57 = scmp.ne.s32.totalorder %s40, %s56
      %p58 = scmp.eq.s32.totalorder %s20, 0
      %p59 = por %p57, %p58
      %s61 = sadd.s32 %s60, 1
      %p64 = scmp.eq.s32.totalorder %s14, 5
      %p65 = scmp.ne.s32.totalorder %s60, %s62
      %p66 = scmp.eq.s32.totalorder %s14, 0
      %p67 = por %p65, %p66
      %p68 = scmp.ne.s32.totalorder %s60, %s62
      %p69 = scmp.eq.s32.totalorder %s19, 5
      %p70 = por %p68, %p69
      %p71 = scmp.ne.s32.totalorder %s62, %s63
      %p72 = scmp.eq.s32.totalorder %s19, 0
      %p73 = por %p71, %p72
      %p74 = scmp.ne.s32.totalorder %s62, %s63
      %p75 = scmp.eq.s32.totalorder %s20, 5
      %p76 = por %p74, %p75
      %p78 = scmp.ne.s32.totalorder %s63, %s77
      %p79 = scmp.eq.s32.totalorder %s20, 0
      %p80 = por %p78, %p79
      %s82 = sadd.s32 %s81, 1
      %p85 = scmp.eq.s32.totalorder %s14, 5
      %p86 = scmp.ne.s32.totalorder %s81, %s83
      %p87 = scmp.eq.s32.totalorder %s14, 0
      %p88 = por %p86, %p87
      %p89 = scmp.ne.s32.totalorder %s81, %s83
      %p90 = scmp.eq.s32.totalorder %s19, 5
      %p91 = por %p89, %p90
      %p92 = scmp.ne.s32.totalorder %s83, %s84
      %p93 = scmp.eq.s32.totalorder %s19, 0
      %p94 = por %p92, %p93
      %p95 = scmp.ne.s32.totalorder %s83, %s84
      %p96 = scmp.eq.s32.totalorder %s20, 5
      %p97 = por %p95, %p96
      %p99 = scmp.ne.s32.totalorder %s84, %s98
      %p100 = scmp.eq.s32.totalorder %s20, 0
      %p101 = por %p99, %p100
      %s103 = sadd.s32 %s102, 1
      %p106 = scmp.eq.s32.totalorder %s14, 5
      %p107 = scmp.ne.s32.totalorder %s102, %s104
      %p108 = scmp.eq.s32.totalorder %s14, 0
      %p109 = por %p107, %p108
      %p110 = scmp.ne.s32.totalorder %s102, %s104
      %p111 = scmp.eq.s32.totalorder %s19, 5
      %p112 = por %p110, %p111
      %p113 = scmp.ne.s32.totalorder %s104, %s105
      %p114 = scmp.eq.s32.totalorder %s19, 0
      %p115 = por %p113, %p114
      %p116 = scmp.ne.s32.totalorder %s104, %s105
      %p117 = scmp.eq.s32.totalorder %s20, 5
      %p118 = por %p116, %p117
      %p120 = scmp.ne.s32.totalorder %s105, %s119
      %p121 = scmp.eq.s32.totalorder %s20, 0
      %p122 = por %p120, %p121
      %s124 = sadd.s32 %s123, 1
      %p127 = scmp.eq.s32.totalorder %s14, 5
      %p128 = scmp.ne.s32.totalorder %s123, %s125
      %p129 = scmp.eq.s32.totalorder %s14, 0
      %p130 = por %p128, %p129
      %p131 = scmp.ne.s32.totalorder %s123, %s125
      %p132 = scmp.eq.s32.totalorder %s19, 5
      %p133 = por %p131, %p132
      %p134 = scmp.ne.s32.totalorder %s125, %s126
      %p135 = scmp.eq.s32.totalorder %s19, 0
      %p136 = por %p134, %p135
      %p137 = scmp.ne.s32.totalorder %s125, %s126
      %p138 = scmp.eq.s32.totalorder %s20, 5
      %p139 = por %p137, %p138
      %p141 = scmp.ne.s32.totalorder %s126, %s140
      %p142 = scmp.eq.s32.totalorder %s20, 0
      %p143 = por %p141, %p142
      %s144 = ssub.s32 %s21, %s33
      %s145 = ssub.s32 %s22, %s29
      %s146 = sor.u32 %s144, %s145
      %p147 = scmp.eq.s32.totalorder %s146, 0
      %s149 = sadd.s32 %s148, 1
      %s150 = scalar_select %p147, %s148, %s149
      %p153 = pneg %p147
      %p154 = scmp.eq.s32.totalorder %s14, 5
      %p155 = por %p153, %p154
      %p156 = scmp.ne.s32.totalorder %s148, %s151
      %p157 = scmp.eq.s32.totalorder %s14, 0
      %p158 = por %p156, %p157
      %p159 = scmp.ne.s32.totalorder %s148, %s151
      %p160 = scmp.eq.s32.totalorder %s19, 5
      %p161 = por %p159, %p160
      %p162 = scmp.ne.s32.totalorder %s151, %s152
      %p163 = scmp.eq.s32.totalorder %s19, 0
      %p164 = por %p162, %p163
      %p165 = scmp.ne.s32.totalorder %s151, %s152
      %p166 = scmp.eq.s32.totalorder %s20, 5
      %p167 = por %p165, %p166
      %p169 = scmp.ne.s32.totalorder %s152, %s168
      %p170 = scmp.eq.s32.totalorder %s20, 0
      %p171 = por %p169, %p170
      %p172 = scmp.le.s32.totalorder 1, %s14
      %p173 = scmp.lt.s32.totalorder %s14, 7
      %p174 = pnand %p172, %p173
      %p175 = pneg %p174
      // Predicated region
      $region9: #{tpu_custom_call.1} parent=5 // pred_check
        _
      $region10: #{tpu_custom_call.1} parent=5 // pred_check_branch
        %177 = sbr.rel (%p174) target = $region12
      $region11: #{tpu_custom_call.1} parent=5 // pred_region
        %s178 = ssub.s32 %s14, 1
        // Predicated region
        $region13: #{tpu_custom_call.1} parent=11 // pred_check
          %p179 = pneg %p73
        $region14: #{tpu_custom_call.1} parent=11 // pred_check_branch
          %181 = sbr.rel (%p179) target = $region16
        $region15: #{tpu_custom_call.1} parent=11 // pred_region
          _
        $region16: #{tpu_custom_call.1} parent=11 // pred_fallthru
          _
        // Predicated region
        $region17: #{tpu_custom_call.1} parent=11 // pred_check
          %p182 = pneg %p94
        $region18: #{tpu_custom_call.1} parent=11 // pred_check_branch
          %184 = sbr.rel (%p182) target = $region20
        $region19: #{tpu_custom_call.1} parent=11 // pred_region
          _
        $region20: #{tpu_custom_call.1} parent=11 // pred_fallthru
          _
        // Predicated region
        $region21: #{tpu_custom_call.1} parent=11 // pred_check
          %p185 = pneg %p115
        $region22: #{tpu_custom_call.1} parent=11 // pred_check_branch
          %187 = sbr.rel (%p185) target = $region24
        $region23: #{tpu_custom_call.1} parent=11 // pred_region
          _
        $region24: #{tpu_custom_call.1} parent=11 // pred_fallthru
          _
        // Predicated region
        $region25: #{tpu_custom_call.1} parent=11 // pred_check
          %p188 = pneg %p136
        $region26: #{tpu_custom_call.1} parent=11 // pred_check_branch
          %190 = sbr.rel (%p188) target = $region28
        $region27: #{tpu_custom_call.1} parent=11 // pred_region
          _
        $region28: #{tpu_custom_call.1} parent=11 // pred_fallthru
          _
      $region12: #{tpu_custom_call.1} parent=5 // pred_fallthru
        _
      %p191 = scmp.lt.s32.totalorder %s14, 6
      // Predicated region
      $region29: #{tpu_custom_call.1} parent=5 // pred_check
        %p192 = pneg %p191
      $region30: #{tpu_custom_call.1} parent=5 // pred_check_branch
        %194 = sbr.rel (%p192) target = $region32
      $region31: #{tpu_custom_call.1} parent=5 // pred_region
        // Predicated region
        $region33: #{tpu_custom_call.1} parent=31 // pred_check
          %p195 = pneg %p46
        $region34: #{tpu_custom_call.1} parent=31 // pred_check_branch
          %197 = sbr.rel (%p195) target = $region36
        $region35: #{tpu_custom_call.1} parent=31 // pred_region
          %p198 = scmp.lt.s32.totalorder %s21, 1
          %s199 = scalar_select %p198, %s21, 1
          %s200 = smul.addr %s199, 4
          %s201 = smul.addr %s200, 4
          %s202 = scalar_lea.vmem %s0, %s201
        $region36: #{tpu_custom_call.1} parent=31 // pred_fallthru
          _
      $region32: #{tpu_custom_call.1} parent=5 // pred_fallthru
        _
      %p203 = scmp.le.s32.totalorder 1, %s14
      %p204 = scmp.lt.s32.totalorder %s14, 7
      %p205 = pnand %p203, %p204
      %p206 = pneg %p205
      // Predicated region
      $region37: #{tpu_custom_call.1} parent=5 // pred_check
        _
      $region38: #{tpu_custom_call.1} parent=5 // pred_check_branch
        %208 = sbr.rel (%p205) target = $region40
      $region39: #{tpu_custom_call.1} parent=5 // pred_region
        %s209 = ssub.s32 %s14, 1
        %p210 = scmp.lt.s32.totalorder %s23, 1
        %s211 = scalar_select %p210, %s23, 1
        %s212 = smul.addr %s211, 4
        %s213 = smul.addr %s212, 4
        %s214 = scalar_lea.vmem %s0, %s213
        %p215 = pneg %p52
        %p216 = pneg %p49
        %p217 = pneg %p73
        %p218 = pneg %p70
        %p219 = pneg %p94
        %p220 = pneg %p91
        %p221 = pneg %p115
        %p222 = pneg %p112
        %p223 = pneg %p136
        %p224 = pneg %p133
        %p225 = pneg %p164
        %p226 = pneg %p161
        %s227 = sand.u32 %s151, 1
        %s228 = scalar_lea.sflag [#allocation3], %s227
        %s229 = sand.u32 %s151, 1
        %s230 = smul.addr %s229, 8
        %s231 = scalar_lea.vmem [#allocation2], %s230
        %p232 = scmp.lt.s32.totalorder %s23, 1
        %s233 = scalar_select %p232, %s23, 1
        %s234 = smul.addr %s233, 4
        %s235 = smul.addr %s234, 4
        %s236 = scalar_lea.vmem %s0, %s235
        %s238 = smul.u32 %s24, 8
        %s239 = sshra.s32 %s238, 3
        %s240 = sand.u32 %s238, 7
        %s241 = smul.addr %s239, 4
        %s242 = scalar_lea.vmem %s236, %s241
        %v243 = vld [vmem:[%s242] sm:$0xf]
        %v244 = vld [vmem:[%s242 + $0x4] sm:$0x3]
        %v245 = vld [vmem:[%s1] sm:$0xf]
        %v246 = vld [vmem:[%s1 + $0x4] sm:$0xf]
        %v247 = vld [vmem:[%s1 + $0x8] sm:$0xf]
        %v248 = vld [vmem:[%s1 + $0xc] sm:$0xf]
        %v251 = vunpack.c.l.b16 %v243
        %v252 = vunpack.c.l.b16 %v244
        %v253 = vpack.c.b16 %v252, %v251
        %v258 = vunpack.c.l.b16 %v245
        %v259 = vunpack.c.l.b16 %v246
        %v260 = vunpack.c.l.b16 %v247
        %v261 = vunpack.c.l.b16 %v248
        %v262 = vpack.c.b16 %v259, %v258
        %v263 = vpack.c.b16 %v261, %v260
        %vm266 = vcmask 261120
        %v268 = vsel %vm266, %v253, 0
        %270 = vmatprep.subr.bf16.mxu0 0
        %271 = vmatpush1.bf16.msra.mxu0 0
        %272 = vmatprep.subr.bf16.mxu0 0
        %273 = vmatpush1.bf16.msra.mxu0 0
        %274 = vmatprep.subr.bf16.mxu0 0
        %275 = vmatpush1.bf16.msra.mxu0 0
        %276 = vmatprep.subr.bf16.mxu0 0
        %277 = vmatpush1.bf16.msra.mxu0 0
        %278 = vmatprep.subr.bf16.mxu0 0
        %279 = vmatpush1.bf16.msra.mxu0 0
        %280 = vmatprep.subr.bf16.mxu0 0
        %281 = vmatpush1.bf16.msra.mxu0 0
        %282 = vmatprep.subr.bf16.mxu0 0
        %283 = vmatpush1.bf16.msra.mxu0 %v263
        %284 = vmatprep.subr.bf16.mxu0 0
        %285 = vmatpush1.bf16.msra.mxu0 %v262
        %286 = vmatprep.subr.bf16.mxu0 0
        %287 = vmatpush2.bf16.msra.mxu0 0
        %288 = vmatprep.subr.bf16.mxu0 0
        %289 = vmatpush2.bf16.msra.mxu0 0
        %290 = vmatprep.subr.bf16.mxu0 0
        %291 = vmatpush2.bf16.msra.mxu0 0
        %292 = vmatprep.subr.bf16.mxu0 0
        %293 = vmatpush2.bf16.msra.mxu0 0
        %294 = vmatprep.subr.bf16.mxu0 0
        %295 = vmatpush2.bf16.msra.mxu0 0
        %296 = vmatprep.subr.bf16.mxu0 0
        %297 = vmatpush2.bf16.msra.mxu0 0
        %298 = vmatprep.subr.bf16.mxu0 0
        %299 = vmatpush2.bf16.msra.mxu0 0
        %300 = vmatprep.subr.bf16.mxu0 0
        %301 = vmatpush2.bf16.msra.mxu0 0
        %302 = vmatprep.mubr.bf16.mxu0 0
        %303 = vmatmul.mubr.bf16.gmra.mxu0 %v268
        %v304 = vpop.f32.mrf.mxu0
        %v305 = vadd.f32 0.0, %v304
        %v306 = vpop.f32.mrf.mxu0
        %v307 = vpop.f32.mrf.mxu0
        %v308 = vadd.f32 0.0, %v307
        %v309 = vpop.f32.mrf.mxu0
        %310 = vdwg.mxu0
        %s311 = scalar_lea.vmem %s1, 16
        %v312 = vld [vmem:[%s311] sm:$0xf]
        %v313 = vld [vmem:[%s311 + $0x4] sm:$0xf]
        %v314 = vld [vmem:[%s311 + $0x8] sm:$0xf]
        %v315 = vld [vmem:[%s311 + $0xc] sm:$0xf]
        %v320 = vunpack.c.l.b16 %v312
        %v321 = vunpack.c.l.b16 %v313
        %v322 = vunpack.c.l.b16 %v314
        %v323 = vunpack.c.l.b16 %v315
        %v324 = vpack.c.b16 %v321, %v320
        %v325 = vpack.c.b16 %v323, %v322
        %328 = vmatprep.subr.bf16.mxu0 0
        %329 = vmatpush1.bf16.msra.mxu0 0
        %330 = vmatprep.subr.bf16.mxu0 0
        %331 = vmatpush1.bf16.msra.mxu0 0
        %332 = vmatprep.subr.bf16.mxu0 0
        %333 = vmatpush1.bf16.msra.mxu0 0
        %334 = vmatprep.subr.bf16.mxu0 0
        %335 = vmatpush1.bf16.msra.mxu0 0
        %336 = vmatprep.subr.bf16.mxu0 0
        %337 = vmatpush1.bf16.msra.mxu0 0
        %338 = vmatprep.subr.bf16.mxu0 0
        %339 = vmatpush1.bf16.msra.mxu0 0
        %340 = vmatprep.subr.bf16.mxu0 0
        %341 = vmatpush1.bf16.msra.mxu0 %v325
        %342 = vmatprep.subr.bf16.mxu0 0
        %343 = vmatpush1.bf16.msra.mxu0 %v324
        %344 = vmatprep.subr.bf16.mxu0 0
        %345 = vmatpush2.bf16.msra.mxu0 0
        %346 = vmatprep.subr.bf16.mxu0 0
        %347 = vmatpush2.bf16.msra.mxu0 0
        %348 = vmatprep.subr.bf16.mxu0 0
        %349 = vmatpush2.bf16.msra.mxu0 0
        %350 = vmatprep.subr.bf16.mxu0 0
        %351 = vmatpush2.bf16.msra.mxu0 0
        %352 = vmatprep.subr.bf16.mxu0 0
        %353 = vmatpush2.bf16.msra.mxu0 0
        %354 = vmatprep.subr.bf16.mxu0 0
        %355 = vmatpush2.bf16.msra.mxu0 0
        %356 = vmatprep.subr.bf16.mxu0 0
        %357 = vmatpush2.bf16.msra.mxu0 0
        %358 = vmatprep.subr.bf16.mxu0 0
        %359 = vmatpush2.bf16.msra.mxu0 0
        %360 = vmatprep.mubr.bf16.mxu0 0
        %361 = vmatmul.mubr.bf16.gmra.mxu0 %v268
        %v362 = vpop.f32.mrf.mxu0
        %v363 = vadd.f32 0.0, %v362
        %v364 = vpop.f32.mrf.mxu0
        %v365 = vpop.f32.mrf.mxu0
        %v366 = vadd.f32 0.0, %v365
        %v367 = vpop.f32.mrf.mxu0
        %368 = vdwg.mxu0
        %s369 = scalar_lea.vmem %s1, 32
        %v370 = vld [vmem:[%s369] sm:$0xf]
        %v371 = vld [vmem:[%s369 + $0x4] sm:$0xf]
        %v372 = vld [vmem:[%s369 + $0x8] sm:$0xf]
        %v373 = vld [vmem:[%s369 + $0xc] sm:$0xf]
        %v378 = vunpack.c.l.b16 %v370
        %v379 = vunpack.c.l.b16 %v371
        %v380 = vunpack.c.l.b16 %v372
        %v381 = vunpack.c.l.b16 %v373
        %v382 = vpack.c.b16 %v379, %v378
        %v383 = vpack.c.b16 %v381, %v380
        %386 = vmatprep.subr.bf16.mxu0 0
        %387 = vmatpush1.bf16.msra.mxu0 0
        %388 = vmatprep.subr.bf16.mxu0 0
        %389 = vmatpush1.bf16.msra.mxu0 0
        %390 = vmatprep.subr.bf16.mxu0 0
        %391 = vmatpush1.bf16.msra.mxu0 0
        %392 = vmatprep.subr.bf16.mxu0 0
        %393 = vmatpush1.bf16.msra.mxu0 0
        %394 = vmatprep.subr.bf16.mxu0 0
        %395 = vmatpush1.bf16.msra.mxu0 0
        %396 = vmatprep.subr.bf16.mxu0 0
        %397 = vmatpush1.bf16.msra.mxu0 0
        %398 = vmatprep.subr.bf16.mxu0 0
        %399 = vmatpush1.bf16.msra.mxu0 %v383
        %400 = vmatprep.subr.bf16.mxu0 0
        %401 = vmatpush1.bf16.msra.mxu0 %v382
        %402 = vmatprep.subr.bf16.mxu0 0
        %403 = vmatpush2.bf16.msra.mxu0 0
        %404 = vmatprep.subr.bf16.mxu0 0
        %405 = vmatpush2.bf16.msra.mxu0 0
        %406 = vmatprep.subr.bf16.mxu0 0
        %407 = vmatpush2.bf16.msra.mxu0 0
        %408 = vmatprep.subr.bf16.mxu0 0
        %409 = vmatpush2.bf16.msra.mxu0 0
        %410 = vmatprep.subr.bf16.mxu0 0
        %411 = vmatpush2.bf16.msra.mxu0 0
        %412 = vmatprep.subr.bf16.mxu0 0
        %413 = vmatpush2.bf16.msra.mxu0 0
        %414 = vmatprep.subr.bf16.mxu0 0
        %415 = vmatpush2.bf16.msra.mxu0 0
        %416 = vmatprep.subr.bf16.mxu0 0
        %417 = vmatpush2.bf16.msra.mxu0 0
        %418 = vmatprep.mubr.bf16.mxu0 0
        %419 = vmatmul.mubr.bf16.gmra.mxu0 %v268
        %v420 = vpop.f32.mrf.mxu0
        %v421 = vadd.f32 0.0, %v420
        %v422 = vpop.f32.mrf.mxu0
        %v423 = vpop.f32.mrf.mxu0
        %v424 = vadd.f32 0.0, %v423
        %v425 = vpop.f32.mrf.mxu0
        %426 = vdwg.mxu0
        %vm429 = vcmask 1046528
        %v430 = vrot.slane %v363, 1
        %v431 = vrot.slane %v366, 1
        %v432 = vsel %vm429, %v430, %v431
        %v435 = vadd.f32 %v305, %v432
        %v436 = vadd.f32 %v308, %v431
        %vm439 = vcmask 1045504
        %v440 = vrot.slane %v421, 2
        %v441 = vrot.slane %v424, 2
        %v442 = vsel %vm439, %v440, %v441
        %v445 = vadd.f32 %v435, %v442
        %v446 = vadd.f32 %v436, %v441
        %v447 = vld [vmem:[%s2] sm:$0x1]
        %v449 = vlaneseq
        %v450 = vshrl.u32 %v449, 7
        %v451 = vsub.s32 0, %v450
        %v452 = vrot.slane %v447, %v451
        %v454 = vadd.f32 %v445, %v452
        %v455 = vadd.f32 %v446, %v452
        %v456 = vmax.f32 %v454, 0.0
        %v457 = vmax.f32 %v455, 0.0
        %s458 = ssub.s32 %s238, 1
        %v459 = vlaneseq
        %v460 = vshrl.u32 %v459, 7
        %v461 = vadd.s32 %v460, 8
        %v462 = vstv %s458
        %v463 = vadd.s32 %v462, %v460
        %v464 = vadd.s32 %v462, %v461
        %vm465 = vcmp.ge.s32.totalorder %v463, 0
        %vm466 = vcmp.ge.s32.totalorder %v464, 0
        %vm467 = vcmp.lt.s32.totalorder %v463, 20
        %vm468 = vcmp.lt.s32.totalorder %v464, 20
        %vm469 = vmand %vm465, %vm467
        %vm470 = vmand %vm466, %vm468
        %v471 = vsel %vm469, 1, 0
        %v472 = vsel %vm470, 1, 0
        %vm473 = vcmp.eq.s32.totalorder %v471, 1
        %vm474 = vcmp.eq.s32.totalorder %v472, 1
        %v475 = vsel %vm473, %v456, 0.0
        %v476 = vsel %vm474, %v457, 0.0
        %v477 = vpack.c.bf16 %v476, %v475
        %v478 = vld [vmem:[%s3] sm:$0xf]
        %v479 = vld [vmem:[%s3 + $0x4] sm:$0xf]
        %v480 = vld [vmem:[%s3 + $0x8] sm:$0xf]
        %v481 = vld [vmem:[%s3 + $0xc] sm:$0xf]
        %v482 = vld [vmem:[%s3 + $0x10] sm:$0xf]
        %v483 = vld [vmem:[%s3 + $0x14] sm:$0xf]
        %v484 = vld [vmem:[%s3 + $0x18] sm:$0xf]
        %v485 = vld [vmem:[%s3 + $0x1c] sm:$0xf]
        %v494 = vunpack.c.l.b16 %v478
        %v495 = vunpack.c.l.b16 %v479
        %v496 = vunpack.c.l.b16 %v480
        %v497 = vunpack.c.l.b16 %v481
        %v498 = vunpack.c.l.b16 %v482
        %v499 = vunpack.c.l.b16 %v483
        %v500 = vunpack.c.l.b16 %v484
        %v501 = vunpack.c.l.b16 %v485
        %v502 = vpack.c.b16 %v495, %v494
        %v503 = vpack.c.b16 %v497, %v496
        %v504 = vpack.c.b16 %v499, %v498
        %v505 = vpack.c.b16 %v501, %v500
        %vm510 = vcmask 523264
        %v512 = vsel %vm510, %v477, 0
        %514 = vmatprep.subr.bf16.mxu0 0
        %515 = vmatpush1.bf16.msra.mxu0 0
        %516 = vmatprep.subr.bf16.mxu0 0
        %517 = vmatpush1.bf16.msra.mxu0 0
        %518 = vmatprep.subr.bf16.mxu0 0
        %519 = vmatpush1.bf16.msra.mxu0 0
        %520 = vmatprep.subr.bf16.mxu0 0
        %521 = vmatpush1.bf16.msra.mxu0 0
        %522 = vmatprep.subr.bf16.mxu0 0
        %523 = vmatpush1.bf16.msra.mxu0 %v505
        %524 = vmatprep.subr.bf16.mxu0 0
        %525 = vmatpush1.bf16.msra.mxu0 %v504
        %526 = vmatprep.subr.bf16.mxu0 0
        %527 = vmatpush1.bf16.msra.mxu0 %v503
        %528 = vmatprep.subr.bf16.mxu0 0
        %529 = vmatpush1.bf16.msra.mxu0 %v502
        %530 = vmatprep.subr.bf16.mxu0 0
        %531 = vmatpush2.bf16.msra.mxu0 0
        %532 = vmatprep.subr.bf16.mxu0 0
        %533 = vmatpush2.bf16.msra.mxu0 0
        %534 = vmatprep.subr.bf16.mxu0 0
        %535 = vmatpush2.bf16.msra.mxu0 0
        %536 = vmatprep.subr.bf16.mxu0 0
        %537 = vmatpush2.bf16.msra.mxu0 0
        %538 = vmatprep.subr.bf16.mxu0 0
        %539 = vmatpush2.bf16.msra.mxu0 0
        %540 = vmatprep.subr.bf16.mxu0 0
        %541 = vmatpush2.bf16.msra.mxu0 0
        %542 = vmatprep.subr.bf16.mxu0 0
        %543 = vmatpush2.bf16.msra.mxu0 0
        %544 = vmatprep.subr.bf16.mxu0 0
        %545 = vmatpush2.bf16.msra.mxu0 0
        %546 = vmatprep.mubr.bf16.mxu0 0
        %547 = vmatmul.mubr.bf16.gmra.mxu0 %v512
        %v548 = vpop.f32.mrf.mxu0
        %v549 = vadd.f32 0.0, %v548
        %v550 = vpop.f32.mrf.mxu0
        %v551 = vpop.f32.mrf.mxu0
        %v552 = vpop.f32.mrf.mxu0
        %553 = vdwg.mxu0
        %s554 = scalar_lea.vmem %s3, 32
        %v555 = vld [vmem:[%s554] sm:$0xf]
        %v556 = vld [vmem:[%s554 + $0x4] sm:$0xf]
        %v557 = vld [vmem:[%s554 + $0x8] sm:$0xf]
        %v558 = vld [vmem:[%s554 + $0xc] sm:$0xf]
        %v559 = vld [vmem:[%s554 + $0x10] sm:$0xf]
        %v560 = vld [vmem:[%s554 + $0x14] sm:$0xf]
        %v561 = vld [vmem:[%s554 + $0x18] sm:$0xf]
        %v562 = vld [vmem:[%s554 + $0x1c] sm:$0xf]
        %v571 = vunpack.c.l.b16 %v555
        %v572 = vunpack.c.l.b16 %v556
        %v573 = vunpack.c.l.b16 %v557
        %v574 = vunpack.c.l.b16 %v558
        %v575 = vunpack.c.l.b16 %v559
        %v576 = vunpack.c.l.b16 %v560
        %v577 = vunpack.c.l.b16 %v561
        %v578 = vunpack.c.l.b16 %v562
        %v579 = vpack.c.b16 %v572, %v571
        %v580 = vpack.c.b16 %v574, %v573
        %v581 = vpack.c.b16 %v576, %v575
        %v582 = vpack.c.b16 %v578, %v577
        %587 = vmatprep.subr.bf16.mxu0 0
        %588 = vmatpush1.bf16.msra.mxu0 0
        %589 = vmatprep.subr.bf16.mxu0 0
        %590 = vmatpush1.bf16.msra.mxu0 0
        %591 = vmatprep.subr.bf16.mxu0 0
        %592 = vmatpush1.bf16.msra.mxu0 0
        %593 = vmatprep.subr.bf16.mxu0 0
        %594 = vmatpush1.bf16.msra.mxu0 0
        %595 = vmatprep.subr.bf16.mxu0 0
        %596 = vmatpush1.bf16.msra.mxu0 %v582
        %597 = vmatprep.subr.bf16.mxu0 0
        %598 = vmatpush1.bf16.msra.mxu0 %v581
        %599 = vmatprep.subr.bf16.mxu0 0
        %600 = vmatpush1.bf16.msra.mxu0 %v580
        %601 = vmatprep.subr.bf16.mxu0 0
        %602 = vmatpush1.bf16.msra.mxu0 %v579
        %603 = vmatprep.subr.bf16.mxu0 0
        %604 = vmatpush2.bf16.msra.mxu0 0
        %605 = vmatprep.subr.bf16.mxu0 0
        %606 = vmatpush2.bf16.msra.mxu0 0
        %607 = vmatprep.subr.bf16.mxu0 0
        %608 = vmatpush2.bf16.msra.mxu0 0
        %609 = vmatprep.subr.bf16.mxu0 0
        %610 = vmatpush2.bf16.msra.mxu0 0
        %611 = vmatprep.subr.bf16.mxu0 0
        %612 = vmatpush2.bf16.msra.mxu0 0
        %613 = vmatprep.subr.bf16.mxu0 0
        %614 = vmatpush2.bf16.msra.mxu0 0
        %615 = vmatprep.subr.bf16.mxu0 0
        %616 = vmatpush2.bf16.msra.mxu0 0
        %617 = vmatprep.subr.bf16.mxu0 0
        %618 = vmatpush2.bf16.msra.mxu0 0
        %619 = vmatprep.mubr.bf16.mxu0 0
        %620 = vmatmul.mubr.bf16.gmra.mxu0 %v512
        %v621 = vpop.f32.mrf.mxu0
        %v622 = vadd.f32 0.0, %v621
        %v623 = vpop.f32.mrf.mxu0
        %v624 = vpop.f32.mrf.mxu0
        %v625 = vadd.f32 0.0, %v624
        %v626 = vpop.f32.mrf.mxu0
        %627 = vdwg.mxu0
        %s628 = scalar_lea.vmem %s3, 64
        %v629 = vld [vmem:[%s628] sm:$0xf]
        %v630 = vld [vmem:[%s628 + $0x4] sm:$0xf]
        %v631 = vld [vmem:[%s628 + $0x8] sm:$0xf]
        %v632 = vld [vmem:[%s628 + $0xc] sm:$0xf]
        %v633 = vld [vmem:[%s628 + $0x10] sm:$0xf]
        %v634 = vld [vmem:[%s628 + $0x14] sm:$0xf]
        %v635 = vld [vmem:[%s628 + $0x18] sm:$0xf]
        %v636 = vld [vmem:[%s628 + $0x1c] sm:$0xf]
        %v645 = vunpack.c.l.b16 %v629
        %v646 = vunpack.c.l.b16 %v630
        %v647 = vunpack.c.l.b16 %v631
        %v648 = vunpack.c.l.b16 %v632
        %v649 = vunpack.c.l.b16 %v633
        %v650 = vunpack.c.l.b16 %v634
        %v651 = vunpack.c.l.b16 %v635
        %v652 = vunpack.c.l.b16 %v636
        %v653 = vpack.c.b16 %v646, %v645
        %v654 = vpack.c.b16 %v648, %v647
        %v655 = vpack.c.b16 %v650, %v649
        %v656 = vpack.c.b16 %v652, %v651
        %661 = vmatprep.subr.bf16.mxu0 0
        %662 = vmatpush1.bf16.msra.mxu0 0
        %663 = vmatprep.subr.bf16.mxu0 0
        %664 = vmatpush1.bf16.msra.mxu0 0
        %665 = vmatprep.subr.bf16.mxu0 0
        %666 = vmatpush1.bf16.msra.mxu0 0
        %667 = vmatprep.subr.bf16.mxu0 0
        %668 = vmatpush1.bf16.msra.mxu0 0
        %669 = vmatprep.subr.bf16.mxu0 0
        %670 = vmatpush1.bf16.msra.mxu0 %v656
        %671 = vmatprep.subr.bf16.mxu0 0
        %672 = vmatpush1.bf16.msra.mxu0 %v655
        %673 = vmatprep.subr.bf16.mxu0 0
        %674 = vmatpush1.bf16.msra.mxu0 %v654
        %675 = vmatprep.subr.bf16.mxu0 0
        %676 = vmatpush1.bf16.msra.mxu0 %v653
        %677 = vmatprep.subr.bf16.mxu0 0
        %678 = vmatpush2.bf16.msra.mxu0 0
        %679 = vmatprep.subr.bf16.mxu0 0
        %680 = vmatpush2.bf16.msra.mxu0 0
        %681 = vmatprep.subr.bf16.mxu0 0
        %682 = vmatpush2.bf16.msra.mxu0 0
        %683 = vmatprep.subr.bf16.mxu0 0
        %684 = vmatpush2.bf16.msra.mxu0 0
        %685 = vmatprep.subr.bf16.mxu0 0
        %686 = vmatpush2.bf16.msra.mxu0 0
        %687 = vmatprep.subr.bf16.mxu0 0
        %688 = vmatpush2.bf16.msra.mxu0 0
        %689 = vmatprep.subr.bf16.mxu0 0
        %690 = vmatpush2.bf16.msra.mxu0 0
        %691 = vmatprep.subr.bf16.mxu0 0
        %692 = vmatpush2.bf16.msra.mxu0 0
        %693 = vmatprep.mubr.bf16.mxu0 0
        %694 = vmatmul.mubr.bf16.gmra.mxu0 %v512
        %v695 = vpop.f32.mrf.mxu0
        %v696 = vadd.f32 0.0, %v695
        %v697 = vpop.f32.mrf.mxu0
        %v698 = vpop.f32.mrf.mxu0
        %v699 = vadd.f32 0.0, %v698
        %v700 = vpop.f32.mrf.mxu0
        %701 = vdwg.mxu0
        %v704 = vrot.slane %v622, 1
        %v705 = vrot.slane %v625, 1
        %v706 = vsel %vm429, %v704, %v705
        %v708 = vadd.f32 %v549, %v706
        %v711 = vrot.slane %v696, 2
        %v712 = vrot.slane %v699, 2
        %v713 = vsel %vm439, %v711, %v712
        %v715 = vadd.f32 %v708, %v713
        %v716 = vld [vmem:[%s4] sm:$0x1]
        %v718 = vlaneseq
        %v719 = vshrl.u32 %v718, 7
        %v720 = vsub.s32 0, %v719
        %v721 = vrot.slane %v716, %v720
        %v723 = vadd.f32 %v715, %v721
        %724 = vst.msk [vmem:[%s231] sm:$0xff] %vm266, %v723
        %s725 = sand.u32 %s151, 1
        %s726 = scalar_lea.sflag [#allocation3], %s725
        %s727 = sand.u32 %s151, 1
        %s728 = smul.addr %s727, 8
        %s729 = scalar_lea.vmem [#allocation2], %s728
        // Predicated region
        $region41: #{tpu_custom_call.1} parent=39 // pred_check
          %p730 = pneg %p161
        $region42: #{tpu_custom_call.1} parent=39 // pred_check_branch
          %732 = sbr.rel (%p730) target = $region44
        $region43: #{tpu_custom_call.1} parent=39 // pred_region
          %s734 = ssub.s32 128, 128
          %735 = vsyncadd %s726, %s734
          %s736 = smul.addr %s23, 3
          %s737 = sadd.s32 %s24, %s736
          %s738 = smul.addr %s737, 128
          %s739 = scalar_lea.hbm %s5, %s738
          %s741 = sshll.u32 %s729, 4
          %s742 = int_to_ptr.vmem [resolvable:$true] %s741
          %744 = dma.vmem_to_hbm [thread:$0]  %s742, 128, %s739, %s726
        $region44: #{tpu_custom_call.1} parent=39 // pred_fallthru
          _
      $region40: #{tpu_custom_call.1} parent=5 // pred_fallthru
        _
      %p745 = scmp.le.s32.totalorder 2, %s14
      // Predicated region
      $region45: #{tpu_custom_call.1} parent=5 // pred_check
        %p746 = pneg %p745
      $region46: #{tpu_custom_call.1} parent=5 // pred_check_branch
        %748 = sbr.rel (%p746) target = $region48
      $region47: #{tpu_custom_call.1} parent=5 // pred_region
        %s749 = ssub.s32 %s14, 2
        // Predicated region
        $region49: #{tpu_custom_call.1} parent=47 // pred_check
          %p750 = pneg %p167
        $region50: #{tpu_custom_call.1} parent=47 // pred_check_branch
          %752 = sbr.rel (%p750) target = $region52
        $region51: #{tpu_custom_call.1} parent=47 // pred_region
          %s753 = sand.u32 %s152, 1
          %s754 = scalar_lea.sflag [#allocation3], %s753
          %s755 = sand.u32 %s152, 1
          %s756 = smul.addr %s755, 8
          %s757 = scalar_lea.vmem [#allocation2], %s756
          %758 = dma.done %s754, 128
        $region52: #{tpu_custom_call.1} parent=47 // pred_fallthru
          _
      $region48: #{tpu_custom_call.1} parent=5 // pred_fallthru
        _
    $region6: #{tpu_custom_call.1} parent=1 // loop_footer
      %s18 = sadd.s32 1, %s14
    $region7: #{tpu_custom_call.1} parent=1 // loop_footer_branch
      %13 = sbr.rel target = $region3
    $region8: #{tpu_custom_call.1} parent=1 // loop_exit
      _
    %759 = vsyncpa [#allocation3], 1
    %s760 = scalar_lea.sflag [#allocation3], 1
    %761 = vsyncpa %s760, 1

</llo_original>
